<compile_context>
chip_gen: v7x
topology: tpu7x:2x2x1
jax: 0.10.0
libtpu: 0.0.40
codegen_flags: <defaults>
</compile_context>

<pallas_src>
import functools

import jax
import jax.numpy as jnp
from jax import lax
from jax.experimental import pallas as pl
from jax.experimental.pallas import tpu as pltpu


def _round_up(n, m):
    return ((n + m - 1) // m) * m


# ----------------------------------------------------------------------------
# Fused kernel: key_mlp(context) + key_mlp(target tile) + attention
# ----------------------------------------------------------------------------
def _fused_attention_kernel(cx_ref, r_ref, tx_ref, w1_ref, b1_ref, w2_ref,
                            b2_ref, o_ref, keys_ref, *, scale):
    # Shapes (leading batch dim squeezed by the BlockSpec):
    #   cx_ref : (Nc, x_dim)        r_ref : (Nc, Dr_pad)    tx_ref : (TILE_Q, x_dim)
    #   w1     : (x_dim, H_pad)     b1    : (1, H_pad)
    #   w2     : (H_pad, Dk_pad)    b2    : (1, Dk_pad)
    #   o_ref  : (TILE_Q, Dr_pad)   keys_ref (scratch) : (Nc, Dk_pad) bf16
    def mlp(x_f32):
        # bf16 operands into the MXU, f32 accumulation, f32 bias + ReLU.
        x = x_f32.astype(jnp.bfloat16)
        h = jnp.dot(x, w1_ref[...].astype(jnp.bfloat16),
                    preferred_element_type=jnp.float32) + b1_ref[...]
        h = jnp.maximum(h, 0.0)
        return jnp.dot(h.astype(jnp.bfloat16), w2_ref[...].astype(jnp.bfloat16),
                       preferred_element_type=jnp.float32) + b2_ref[...]

    # Compute keys once per batch (first query tile); reuse for remaining tiles.
    @pl.when(pl.program_id(1) == 0)
    def _():
        keys_ref[...] = mlp(cx_ref[...]).astype(jnp.bfloat16)

    # Query MLP for this Nt tile; fold 1/sqrt(Dk) into q (cheaper than scaling s).
    q = (mlp(tx_ref[...]) * scale).astype(jnp.bfloat16)            # (TILE_Q, Dk_pad)

    # Q K^T without materializing k.T: contract last dim of both operands.
    # Padded Dk columns of q and keys are exactly zero -> no contribution.
    s = lax.dot_general(q, keys_ref[...],
                        dimension_numbers=(((1,), (1,)), ((), ())),
                        preferred_element_type=jnp.float32)        # (TILE_Q, Nc) f32

    # Numerically stable softmax (stats kept in f32); denominator via the EUP
    # approximate reciprocal (use an exact divide if bit-parity is required).
    m = jnp.max(s, axis=-1, keepdims=True)
    p = jnp.exp(s - m)
    p = p * pl.reciprocal(jnp.sum(p, axis=-1, keepdims=True), approx=True)

    # P @ r on the MXU with bf16 operands, f32 accumulation, lane-dense store.
    o_ref[...] = jnp.dot(p.astype(jnp.bfloat16), r_ref[...].astype(jnp.bfloat16),
                         preferred_element_type=jnp.float32).astype(o_ref.dtype)


# ----------------------------------------------------------------------------
# BasicAttention.forward equivalent (single pallas_call)
# ----------------------------------------------------------------------------
def basic_attention_forward(params, context_x, r, target_x, *, tile_q=128):
    w1, b1, w2, b2 = params
    B, Nc, x_dim = context_x.shape
    _, _, Dr = r.shape
    _, Nt, _ = target_x.shape
    H = w1.shape[1]
    Dk = w2.shape[1]
    scale = 1.0 / float(Dk) ** 0.5          # scale uses the *real* key_dim

    # ---- lane padding: make H / Dk / Dr multiples of 128 (exact: zero pad) ----
    H_pad = _round_up(H, 128)
    Dk_pad = _round_up(Dk, 128)
    Dr_pad = _round_up(Dr, 128)

    w1p = jnp.pad(w1, ((0, 0), (0, H_pad - H)))
    b1p = jnp.pad(b1, ((0, 0), (0, H_pad - H)))
    w2p = jnp.pad(w2, ((0, H_pad - H), (0, Dk_pad - Dk)))
    b2p = jnp.pad(b2, ((0, 0), (0, Dk_pad - Dk)))
    rp = jnp.pad(r, ((0, 0), (0, 0), (0, Dr_pad - Dr)))

    # Query tile: multiple of 8 when tiling, or the full Nt when Nt is small
    # (satisfies the (8, 128) block constraint either way).
    TILE_Q = tile_q if Nt >= tile_q else Nt
    grid = (B, pl.cdiv(Nt, TILE_Q))

    kernel = functools.partial(_fused_attention_kernel, scale=scale)

    # Advisory cost estimate so XLA schedules around the custom call sensibly.
    flops = int(2 * B * (Nc + Nt) * (x_dim * H_pad + H_pad * Dk_pad)  # both MLP passes
                + 2 * B * Nt * Nc * (Dk_pad + Dr_pad))                # QK^T and P @ r
    cost = pl.CostEstimate(
        flops=flops,
        transcendentals=int(B * Nt * Nc),
        bytes_accessed=int(4 * (context_x.size + rp.size + target_x.size
                                + w1p.size + b1p.size + w2p.size + b2p.size
                                + B * Nt * Dr_pad)),
    )

    # ---- VMEM budget (double-buffered blocks + weights + scratch + staging) ----
    block_bytes = 4 * (Nc * x_dim + Nc * Dr_pad + TILE_Q * x_dim + TILE_Q * Dr_pad
                       + x_dim * H_pad + H_pad + H_pad * Dk_pad + Dk_pad)
    scratch_bytes = 2 * Nc * Dk_pad                       # bf16 keys
    staging_bytes = 4 * 4 * TILE_Q * max(Nc, Dk_pad, Dr_pad)
    vmem_limit = int(min(64 * 1024 * 1024,                # fits v7x physical VMEM
                         max(16 * 1024 * 1024,
                             int(1.5 * (2 * block_bytes + scratch_bytes
                                        + staging_bytes)))))

    grid_spec = pltpu.PrefetchScalarGridSpec(
        num_scalar_prefetch=0,
        grid=grid,
        in_specs=[
            # Per-batch context / r blocks (constant across qt -> fetched once per batch).
            pl.BlockSpec((None, Nc, x_dim), lambda b, qt: (b, 0, 0)),
            pl.BlockSpec((None, Nc, Dr_pad), lambda b, qt: (b, 0, 0)),
            # Query tile.
            pl.BlockSpec((None, TILE_Q, x_dim), lambda b, qt: (b, qt, 0)),
            # MLP weights: constant block index -> loaded from HBM once.
            pl.BlockSpec((x_dim, H_pad), lambda b, qt: (0, 0)),
            pl.BlockSpec((1, H_pad), lambda b, qt: (0, 0)),
            pl.BlockSpec((H_pad, Dk_pad), lambda b, qt: (0, 0)),
            pl.BlockSpec((1, Dk_pad), lambda b, qt: (0, 0)),
        ],
        out_specs=pl.BlockSpec((None, TILE_Q, Dr_pad), lambda b, qt: (b, qt, 0)),
        scratch_shapes=[pltpu.VMEM((Nc, Dk_pad), jnp.bfloat16)],   # resident keys
    )

    out = pl.pallas_call(
        kernel,
        out_shape=jax.ShapeDtypeStruct((B, Nt, Dr_pad), jnp.float32),
        grid_spec=grid_spec,
        compiler_params=pltpu.CompilerParams(
            # batch axis shards across cores; qt axis carries the keys scratch.
            dimension_semantics=("parallel", "arbitrary"),
            vmem_limit_bytes=vmem_limit),
        cost_estimate=cost,
    )(context_x, rp, target_x, w1p, b1p, w2p, b2p)

    if Dr_pad != Dr:
        out = out[:, :, :Dr]
    return out.astype(context_x.dtype)


# ----------------------------------------------------------------------------
# Pure-JAX reference for correctness check.
# ----------------------------------------------------------------------------
def _reference(params, context_x, r, target_x):
    w1, b1, w2, b2 = params

    def mlp(x):
        h = jnp.maximum(x @ w1 + b1[0], 0.0)
        return h @ w2 + b2[0]

    keys = mlp(context_x)
    query = mlp(target_x)
    scale = 1.0 / jnp.sqrt(jnp.float32(keys.shape[-1]))
    s = jnp.einsum("btd,bcd->btc", query, keys) * scale
    p = jax.nn.softmax(s, axis=-1)
    return jnp.einsum("btc,bcr->btr", p, r)


if __name__ == "__main__":
    B, Nc, Nt = 2, 16, 8
    x_dim, hidden, key_dim, r_dim = 4, 32, 32, 32

    key = jax.random.PRNGKey(0)
    k1, k2, k3, k4, k5, k6, k7 = jax.random.split(key, 7)

    # Deterministic parameter init (synthetic; shapes from the key_mlp definition).
    w1 = jax.random.normal(k1, (x_dim, hidden), jnp.float32) * 0.2
    b1 = jax.random.normal(k2, (1, hidden), jnp.float32) * 0.1
    w2 = jax.random.normal(k3, (hidden, key_dim), jnp.float32) * 0.2
    b2 = jax.random.normal(k4, (1, key_dim), jnp.float32) * 0.1
    params = (w1, b1, w2, b2)

    context_x = jax.random.normal(k5, (B, Nc, x_dim), jnp.float32)
    r = jax.random.normal(k6, (B, Nc, r_dim), jnp.float32)
    target_x = jax.random.normal(k7, (B, Nt, x_dim), jnp.float32)

    out = basic_attention_forward(params, context_x, r, target_x)
    out = jax.block_until_ready(out)

    ref = _reference(params, context_x, r, target_x)
    assert out.shape == (B, Nt, r_dim)
    # Tolerance relaxed vs pure-f32: bf16 MXU operands (f32 accumulation) plus
    # the EUP approximate reciprocal in the softmax denominator.
    assert jnp.allclose(out, ref, atol=3e-2, rtol=3e-2), "mismatch vs reference"

    print("KERNEL_OK")
</pallas_src>

<mosaic_0001>
module attributes {stable_mosaic.version = 11 : i64} {
  func.func @_fused_attention_kernel(%arg0: i32, %arg1: i32, %arg2: memref<1x16x4xf32, #tpu.memory_space<vmem>>, %arg3: memref<1x16x128xf32, #tpu.memory_space<vmem>>, %arg4: memref<1x8x4xf32, #tpu.memory_space<vmem>>, %arg5: memref<4x128xf32, #tpu.memory_space<vmem>>, %arg6: memref<1x128xf32, #tpu.memory_space<vmem>>, %arg7: memref<128x128xf32, #tpu.memory_space<vmem>>, %arg8: memref<1x128xf32, #tpu.memory_space<vmem>>, %arg9: memref<1x8x128xf32, #tpu.memory_space<vmem>>, %arg10: memref<16x128xbf16, #tpu.memory_space<vmem>>) attributes {dimension_semantics = [#tpu.dimension_semantics<parallel>, #tpu.dimension_semantics<arbitrary>], iteration_bounds = array<i64: 2, 1>, scalar_prefetch = 0 : i64, scratch_operands = 1 : i64, tpu.core_type = #tpu.core_type<tc>, window_params = [{transform_indices = @transform_0, window_bounds = array<i64: 1, 16, 4>}, {transform_indices = @transform_1, window_bounds = array<i64: 1, 16, 128>}, {transform_indices = @transform_2, window_bounds = array<i64: 1, 8, 4>}, {pipeline_mode = #tpu.pipeline_mode<synchronous>, transform_indices = @transform_3, window_bounds = array<i64: 4, 128>}, {pipeline_mode = #tpu.pipeline_mode<synchronous>, transform_indices = @transform_4, window_bounds = array<i64: 1, 128>}, {pipeline_mode = #tpu.pipeline_mode<synchronous>, transform_indices = @transform_5, window_bounds = array<i64: 128, 128>}, {pipeline_mode = #tpu.pipeline_mode<synchronous>, transform_indices = @transform_6, window_bounds = array<i64: 1, 128>}, {transform_indices = @transform_7, window_bounds = array<i64: 1, 8, 128>}]} {
    %c0_i32 = arith.constant 0 : i32
    %0 = arith.cmpi eq, %arg1, %c0_i32 : i32
    %1 = arith.extui %0 : i1 to i32
    %c0_i32_0 = arith.constant 0 : i32
    %2 = arith.cmpi ne, %1, %c0_i32_0 : i32
    scf.if %2 {
      %c0_26 = arith.constant 0 : index
      %c0_27 = arith.constant 0 : index
      %c0_28 = arith.constant 0 : index
      %44 = vector.load %arg2[%c0_26, %c0_27, %c0_28] : memref<1x16x4xf32, #tpu.memory_space<vmem>>, vector<1x16x4xf32>
      %45 = vector.shape_cast %44 : vector<1x16x4xf32> to vector<16x4xf32>
      %46 = arith.truncf %45 : vector<16x4xf32> to vector<16x4xbf16>
      %c0_29 = arith.constant 0 : index
      %c0_30 = arith.constant 0 : index
      %47 = vector.load %arg5[%c0_29, %c0_30] : memref<4x128xf32, #tpu.memory_space<vmem>>, vector<4x128xf32>
      %48 = arith.truncf %47 : vector<4x128xf32> to vector<4x128xbf16>
      %cst_31 = arith.constant dense<0.000000e+00> : vector<16x128xf32>
      %49 = tpu.matmul %46, %48, %cst_31 {dimension_numbers = #tpu.dot_dimension_numbers<[1], [0], [0], [1], [0, 0, 1, 1], [], []>} : vector<16x4xbf16>, vector<4x128xbf16>, vector<16x128xf32> -> vector<16x128xf32>
      %c0_32 = arith.constant 0 : index
      %c0_33 = arith.constant 0 : index
      %50 = vector.load %arg6[%c0_32, %c0_33] : memref<1x128xf32, #tpu.memory_space<vmem>>, vector<1x128xf32>
      %51 = vector.broadcast %50 : vector<1x128xf32> to vector<16x128xf32>
      %52 = arith.addf %49, %51 : vector<16x128xf32>
      %cst_34 = arith.constant 0.000000e+00 : f32
      %53 = vector.broadcast %cst_34 : f32 to vector<16x128xf32>
      %54 = arith.maximumf %52, %53 : vector<16x128xf32>
      %55 = arith.truncf %54 : vector<16x128xf32> to vector<16x128xbf16>
      %c0_35 = arith.constant 0 : index
      %c0_36 = arith.constant 0 : index
      %56 = vector.load %arg7[%c0_35, %c0_36] : memref<128x128xf32, #tpu.memory_space<vmem>>, vector<128x128xf32>
      %57 = arith.truncf %56 : vector<128x128xf32> to vector<128x128xbf16>
      %cst_37 = arith.constant dense<0.000000e+00> : vector<16x128xf32>
      %58 = tpu.matmul %55, %57, %cst_37 {dimension_numbers = #tpu.dot_dimension_numbers<[1], [0], [0], [1], [0, 0, 1, 1], [], []>} : vector<16x128xbf16>, vector<128x128xbf16>, vector<16x128xf32> -> vector<16x128xf32>
      %c0_38 = arith.constant 0 : index
      %c0_39 = arith.constant 0 : index
      %59 = vector.load %arg8[%c0_38, %c0_39] : memref<1x128xf32, #tpu.memory_space<vmem>>, vector<1x128xf32>
      %60 = vector.broadcast %59 : vector<1x128xf32> to vector<16x128xf32>
      %61 = arith.addf %58, %60 : vector<16x128xf32>
      %62 = arith.truncf %61 : vector<16x128xf32> to vector<16x128xbf16>
      %c0_40 = arith.constant 0 : index
      %c0_41 = arith.constant 0 : index
      %63 = vector.load %arg10[%c0_40, %c0_41] : memref<16x128xbf16, #tpu.memory_space<vmem>>, vector<16x128xbf16>
      tpu.vector_store %arg10[%c0_40, %c0_41], %62 {strides = array<i32>} : memref<16x128xbf16, #tpu.memory_space<vmem>>, vector<16x128xbf16>,
    } else {
    }
    %c0 = arith.constant 0 : index
    %c0_1 = arith.constant 0 : index
    %c0_2 = arith.constant 0 : index
    %3 = vector.load %arg4[%c0, %c0_1, %c0_2] : memref<1x8x4xf32, #tpu.memory_space<vmem>>, vector<1x8x4xf32>
    %4 = vector.shape_cast %3 : vector<1x8x4xf32> to vector<8x4xf32>
    %5 = arith.truncf %4 : vector<8x4xf32> to vector<8x4xbf16>
    %c0_3 = arith.constant 0 : index
    %c0_4 = arith.constant 0 : index
    %6 = vector.load %arg5[%c0_3, %c0_4] : memref<4x128xf32, #tpu.memory_space<vmem>>, vector<4x128xf32>
    %7 = arith.truncf %6 : vector<4x128xf32> to vector<4x128xbf16>
    %cst = arith.constant dense<0.000000e+00> : vector<8x128xf32>
    %8 = tpu.matmul %5, %7, %cst {dimension_numbers = #tpu.dot_dimension_numbers<[1], [0], [0], [1], [0, 0, 1, 1], [], []>} : vector<8x4xbf16>, vector<4x128xbf16>, vector<8x128xf32> -> vector<8x128xf32>
    %c0_5 = arith.constant 0 : index
    %c0_6 = arith.constant 0 : index
    %9 = vector.load %arg6[%c0_5, %c0_6] : memref<1x128xf32, #tpu.memory_space<vmem>>, vector<1x128xf32>
    %10 = vector.broadcast %9 : vector<1x128xf32> to vector<8x128xf32>
    %11 = arith.addf %8, %10 : vector<8x128xf32>
    %cst_7 = arith.constant 0.000000e+00 : f32
    %12 = vector.broadcast %cst_7 : f32 to vector<8x128xf32>
    %13 = arith.maximumf %11, %12 : vector<8x128xf32>
    %14 = arith.truncf %13 : vector<8x128xf32> to vector<8x128xbf16>
    %c0_8 = arith.constant 0 : index
    %c0_9 = arith.constant 0 : index
    %15 = vector.load %arg7[%c0_8, %c0_9] : memref<128x128xf32, #tpu.memory_space<vmem>>, vector<128x128xf32>
    %16 = arith.truncf %15 : vector<128x128xf32> to vector<128x128xbf16>
    %cst_10 = arith.constant dense<0.000000e+00> : vector<8x128xf32>
    %17 = tpu.matmul %14, %16, %cst_10 {dimension_numbers = #tpu.dot_dimension_numbers<[1], [0], [0], [1], [0, 0, 1, 1], [], []>} : vector<8x128xbf16>, vector<128x128xbf16>, vector<8x128xf32> -> vector<8x128xf32>
    %c0_11 = arith.constant 0 : index
    %c0_12 = arith.constant 0 : index
    %18 = vector.load %arg8[%c0_11, %c0_12] : memref<1x128xf32, #tpu.memory_space<vmem>>, vector<1x128xf32>
    %19 = vector.broadcast %18 : vector<1x128xf32> to vector<8x128xf32>
    %20 = arith.addf %17, %19 : vector<8x128xf32>
    %cst_13 = arith.constant 0.176776692 : f32
    %21 = vector.broadcast %cst_13 : f32 to vector<8x128xf32>
    %22 = arith.mulf %20, %21 : vector<8x128xf32>
    %23 = arith.truncf %22 : vector<8x128xf32> to vector<8x128xbf16>
    %c0_14 = arith.constant 0 : index
    %c0_15 = arith.constant 0 : index
    %24 = vector.load %arg10[%c0_14, %c0_15] : memref<16x128xbf16, #tpu.memory_space<vmem>>, vector<16x128xbf16>
    %cst_16 = arith.constant dense<0.000000e+00> : vector<8x16xf32>
    %25 = tpu.matmul %23, %24, %cst_16 {dimension_numbers = #tpu.dot_dimension_numbers<[1], [1], [0], [0], [0, 0, 1, 0], [], []>} : vector<8x128xbf16>, vector<16x128xbf16>, vector<8x16xf32> -> vector<8x16xf32>
    %cst_17 = arith.constant dense<0xFF800000> : vector<8xf32>
    %26 = vector.multi_reduction <maximumf>, %25, %cst_17 [1] : vector<8x16xf32> to vector<8xf32>
    %27 = vector.shape_cast %26 : vector<8xf32> to vector<8x1xf32>
    %28 = vector.broadcast %27 : vector<8x1xf32> to vector<8x16xf32>
    %29 = arith.subf %25, %28 : vector<8x16xf32>
    %30 = math.exp %29 : vector<8x16xf32>
    %cst_18 = arith.constant dense<0.000000e+00> : vector<8xf32>
    %31 = vector.multi_reduction <add>, %30, %cst_18 [1] : vector<8x16xf32> to vector<8xf32>
    %32 = vector.shape_cast %31 : vector<8xf32> to vector<8x1xf32>
    %33 = tpu.reciprocal %32 {approx = true} : vector<8x1xf32> -> vector<8x1xf32>
    %34 = vector.broadcast %33 : vector<8x1xf32> to vector<8x16xf32>
    %35 = arith.mulf %30, %34 : vector<8x16xf32>
    %36 = arith.truncf %35 : vector<8x16xf32> to vector<8x16xbf16>
    %c0_19 = arith.constant 0 : index
    %c0_20 = arith.constant 0 : index
    %c0_21 = arith.constant 0 : index
    %37 = vector.load %arg3[%c0_19, %c0_20, %c0_21] : memref<1x16x128xf32, #tpu.memory_space<vmem>>, vector<1x16x128xf32>
    %38 = vector.shape_cast %37 : vector<1x16x128xf32> to vector<16x128xf32>
    %39 = arith.truncf %38 : vector<16x128xf32> to vector<16x128xbf16>
    %cst_22 = arith.constant dense<0.000000e+00> : vector<8x128xf32>
    %40 = tpu.matmul %36, %39, %cst_22 {dimension_numbers = #tpu.dot_dimension_numbers<[1], [0], [0], [1], [0, 0, 1, 1], [], []>} : vector<8x16xbf16>, vector<16x128xbf16>, vector<8x128xf32> -> vector<8x128xf32>
    %c0_23 = arith.constant 0 : index
    %c0_24 = arith.constant 0 : index
    %c0_25 = arith.constant 0 : index
    %41 = vector.load %arg9[%c0_23, %c0_24, %c0_25] : memref<1x8x128xf32, #tpu.memory_space<vmem>>, vector<1x8x128xf32>
    %42 = vector.shape_cast %41 : vector<1x8x128xf32> to vector<8x128xf32>
    %43 = vector.shape_cast %40 : vector<8x128xf32> to vector<1x8x128xf32>
    tpu.vector_store %arg9[%c0_23, %c0_24, %c0_25], %43 {strides = array<i32>} : memref<1x8x128xf32, #tpu.memory_space<vmem>>, vector<1x8x128xf32>,
    return
  }
  func.func @transform_0(%arg0: i32, %arg1: i32) -> (i32, i32, i32) {
    %c0_i32 = arith.constant 0 : i32
    %c0_i32_0 = arith.constant 0 : i32
    %c0_i32_1 = arith.constant 0 : i32
    return %arg0, %c0_i32, %c0_i32_0 : i32, i32, i32
  }
  func.func @transform_1(%arg0: i32, %arg1: i32) -> (i32, i32, i32) {
    %c0_i32 = arith.constant 0 : i32
    %c0_i32_0 = arith.constant 0 : i32
    %c0_i32_1 = arith.constant 0 : i32
    return %arg0, %c0_i32, %c0_i32_0 : i32, i32, i32
  }
  func.func @transform_2(%arg0: i32, %arg1: i32) -> (i32, i32, i32) {
    %c0_i32 = arith.constant 0 : i32
    %c0_i32_0 = arith.constant 0 : i32
    return %arg0, %arg1, %c0_i32 : i32, i32, i32
  }
  func.func @transform_3(%arg0: i32, %arg1: i32) -> (i32, i32) {
    %c0_i32 = arith.constant 0 : i32
    %c0_i32_0 = arith.constant 0 : i32
    %c0_i32_1 = arith.constant 0 : i32
    return %c0_i32, %c0_i32_0 : i32, i32
  }
  func.func @transform_4(%arg0: i32, %arg1: i32) -> (i32, i32) {
    %c0_i32 = arith.constant 0 : i32
    %c0_i32_0 = arith.constant 0 : i32
    %c0_i32_1 = arith.constant 0 : i32
    return %c0_i32, %c0_i32_0 : i32, i32
  }
  func.func @transform_5(%arg0: i32, %arg1: i32) -> (i32, i32) {
    %c0_i32 = arith.constant 0 : i32
    %c0_i32_0 = arith.constant 0 : i32
    %c0_i32_1 = arith.constant 0 : i32
    return %c0_i32, %c0_i32_0 : i32, i32
  }
  func.func @transform_6(%arg0: i32, %arg1: i32) -> (i32, i32) {
    %c0_i32 = arith.constant 0 : i32
    %c0_i32_0 = arith.constant 0 : i32
    %c0_i32_1 = arith.constant 0 : i32
    return %c0_i32, %c0_i32_0 : i32, i32
  }
  func.func @transform_7(%arg0: i32, %arg1: i32) -> (i32, i32, i32) {
    %c0_i32 = arith.constant 0 : i32
    %c0_i32_0 = arith.constant 0 : i32
    return %arg0, %arg1, %c0_i32 : i32, i32, i32
  }
}

</mosaic_0001>

<llo_original>
// kernel: tpu_custom_call.1
$region0: #{tpu_custom_call.1}
  #allocation0 [shape = 'u32[]', space=smem, size = 0x4, offset = 0x4, fixed_abs, tag = 'smem constant byte address 0x4 - core index']
  #allocation1 [shape = 'u32[144,128]{1,0:T(1,128)}', space=vmem, size = 0x12000, scoped, tag = 'internal scratch']
  #allocation2 [shape = 'bf16[16,128]{1,0:T(16,128)(2,1)}', space=vmem, size = 0x1000, scoped, tag = 'scratch operand']
  %s0 = inlined_call_operand.vmem [shape: f32[2,16,4], index: 0, kind: input, shape index: {}]
  %s1 = inlined_call_operand.vmem [shape: f32[2,16,128], index: 1, kind: input, shape index: {}]
  %s2 = inlined_call_operand.vmem [shape: f32[2,8,4], index: 2, kind: input, shape index: {}]
  %s3 = inlined_call_operand.vmem [shape: f32[4,128], index: 3, kind: input, shape index: {}]
  %s4 = inlined_call_operand.vmem [shape: f32[1,128], index: 4, kind: input, shape index: {}]
  %s5 = inlined_call_operand.hbm [shape: f32[128,128], index: 5, kind: input, shape index: {}]
  %s6 = inlined_call_operand.vmem [shape: f32[1,128], index: 6, kind: input, shape index: {}]
  %s7 = inlined_call_operand.hbm [shape: f32[2,8,128], index: 7, kind: output, shape index: {}]
  %s8 = sld [smem:[#allocation0]]
  $region69: #{tpu_custom_call.1} parent=0
    _
  %s10 = ssub.s32 1, %s8
  %s11 = scalar_select 0, %s10, %s8
  $region1: #{tpu_custom_call.1} parent=0
    #allocation3 [shape = 'u8[65536]{0}', space=vmem, size = 0x10000, scoped, tag = 'input window, operand 5, single buffered']
    #allocation4 [shape = 's32[2]{0}', space=sflag, size = 0x8, scoped, tag = 'scoped memory for tpu_custom_call.1']
    #allocation5 [shape = 's32[2]{0}', space=sflag, size = 0x8, scoped, tag = 'scoped memory for tpu_custom_call.1']
    #allocation6 [shape = 'u8[8192]{0}', space=vmem, size = 0x2000, scoped, tag = 'output window, operand 0']
    %12 = vsyncpa [#allocation4], 0
    %13 = vsyncpa [#allocation5], 0
    %s14 = scalar_lea.sflag [#allocation5], 1
    %15 = vsyncpa %s14, 0
    loop: start=0, step=1, limit=4
    $region2: #{tpu_custom_call.1} parent=1 // loop_pre_header
      _
    $region3: #{tpu_custom_call.1} parent=1 // loop_header
      %s17 = sphi 0, %s21
      %p18 = scmp.ge.s32.totalorder %s17, 4
      %s24 = sphi 0, %s36
      %s25 = sphi 0, %s32
      %s26 = sphi 0, %s24
      %s27 = sphi 0, %s25
      %s28 = sphi 0, %s26
      %s29 = sphi 0, %s27
      %s39 = sphi 0, %s41
      %s42 = sphi 0, %s39
      %s43 = sphi 0, %s42
      %s59 = sphi 0, %s43
      %s65 = sphi 0, %s67
      %s68 = sphi 0, %s65
      %s69 = sphi 0, %s68
      %s85 = sphi 0, %s69
      %s93 = sphi 0, %s95
      %s96 = sphi 0, %s93
      %s97 = sphi 0, %s96
      %s113 = sphi 0, %s97
      %s117 = sphi 0, %s117
      %s119 = sphi 0, %s117
      %s120 = sphi 0, %s119
      %s134 = sphi 0, %s120
      %s138 = sphi 0, %s138
      %s140 = sphi 0, %s138
      %s141 = sphi 0, %s140
      %s155 = sphi 0, %s141
      %s159 = sphi 0, %s159
      %s161 = sphi 0, %s159
      %s162 = sphi 0, %s161
      %s176 = sphi 0, %s162
      %s180 = sphi 0, %s180
      %s182 = sphi 0, %s180
      %s183 = sphi 0, %s182
      %s197 = sphi 0, %s183
      %s205 = sphi 0, %s207
      %s208 = sphi 0, %s205
      %s209 = sphi 0, %s208
      %s225 = sphi 0, %s209
    $region4: #{tpu_custom_call.1} parent=1 // loop_header_branch
      %20 = sbr.rel (%p18) target = $region8
    $region5: #{tpu_custom_call.1} parent=1 // loop_body
      %s22 = ssub.s32 %s17, 1
      %s23 = ssub.s32 %s17, 2
      %s30 = sadd.s32 1, %s25
      %p31 = scmp.ge.s32.totalorder %s30, 1
      %s32 = scalar_select %p31, 0, %s30
      %s33 = sadd.s32 1, %s24
      %s34 = scalar_select %p31, %s33, %s24
      %p35 = scmp.ge.s32.totalorder %s34, 2
      %s36 = scalar_select %p35, 0, %s34
      %s37 = ssub.s32 %s24, %s36
      %p38 = scmp.eq.s32.totalorder %s37, 0
      %s40 = sadd.s32 %s39, 1
      %s41 = scalar_select %p38, %s39, %s40
      %p44 = pneg %p38
      %p45 = scmp.eq.s32.totalorder %s17, 1
      %p46 = por %p44, %p45
      %p47 = scmp.ne.s32.totalorder %s39, %s42
      %p48 = scmp.eq.s32.totalorder %s17, 0
      %p49 = por %p47, %p48
      %p50 = scmp.ne.s32.totalorder %s39, %s42
      %p51 = scmp.eq.s32.totalorder %s22, 1
      %p52 = por %p50, %p51
      %p53 = scmp.ne.s32.totalorder %s42, %s43
      %p54 = scmp.eq.s32.totalorder %s22, 0
      %p55 = por %p53, %p54
      %p56 = scmp.ne.s32.totalorder %s42, %s43
      %p57 = scmp.eq.s32.totalorder %s23, 1
      %p58 = por %p56, %p57
      %p60 = scmp.ne.s32.totalorder %s43, %s59
      %p61 = scmp.eq.s32.totalorder %s23, 0
      %p62 = por %p60, %p61
      %s63 = ssub.s32 %s24, %s36
      %p64 = scmp.eq.s32.totalorder %s63, 0
      %s66 = sadd.s32 %s65, 1
      %s67 = scalar_select %p64, %s65, %s66
      %p70 = pneg %p64
      %p71 = scmp.eq.s32.totalorder %s17, 1
      %p72 = por %p70, %p71
      %p73 = scmp.ne.s32.totalorder %s65, %s68
      %p74 = scmp.eq.s32.totalorder %s17, 0
      %p75 = por %p73, %p74
      %p76 = scmp.ne.s32.totalorder %s65, %s68
      %p77 = scmp.eq.s32.totalorder %s22, 1
      %p78 = por %p76, %p77
      %p79 = scmp.ne.s32.totalorder %s68, %s69
      %p80 = scmp.eq.s32.totalorder %s22, 0
      %p81 = por %p79, %p80
      %p82 = scmp.ne.s32.totalorder %s68, %s69
      %p83 = scmp.eq.s32.totalorder %s23, 1
      %p84 = por %p82, %p83
      %p86 = scmp.ne.s32.totalorder %s69, %s85
      %p87 = scmp.eq.s32.totalorder %s23, 0
      %p88 = por %p86, %p87
      %s89 = ssub.s32 %s24, %s36
      %s90 = ssub.s32 %s25, %s32
      %s91 = sor.u32 %s89, %s90
      %p92 = scmp.eq.s32.totalorder %s91, 0
      %s94 = sadd.s32 %s93, 1
      %s95 = scalar_select %p92, %s93, %s94
      %p98 = pneg %p92
      %p99 = scmp.eq.s32.totalorder %s17, 1
      %p100 = por %p98, %p99
      %p101 = scmp.ne.s32.totalorder %s93, %s96
      %p102 = scmp.eq.s32.totalorder %s17, 0
      %p103 = por %p101, %p102
      %p104 = scmp.ne.s32.totalorder %s93, %s96
      %p105 = scmp.eq.s32.totalorder %s22, 1
      %p106 = por %p104, %p105
      %p107 = scmp.ne.s32.totalorder %s96, %s97
      %p108 = scmp.eq.s32.totalorder %s22, 0
      %p109 = por %p107, %p108
      %p110 = scmp.ne.s32.totalorder %s96, %s97
      %p111 = scmp.eq.s32.totalorder %s23, 1
      %p112 = por %p110, %p111
      %p114 = scmp.ne.s32.totalorder %s97, %s113
      %p115 = scmp.eq.s32.totalorder %s23, 0
      %p116 = por %p114, %p115
      %s118 = sadd.s32 %s117, 1
      %p121 = scmp.eq.s32.totalorder %s17, 1
      %p122 = scmp.ne.s32.totalorder %s117, %s119
      %p123 = scmp.eq.s32.totalorder %s17, 0
      %p124 = por %p122, %p123
      %p125 = scmp.ne.s32.totalorder %s117, %s119
      %p126 = scmp.eq.s32.totalorder %s22, 1
      %p127 = por %p125, %p126
      %p128 = scmp.ne.s32.totalorder %s119, %s120
      %p129 = scmp.eq.s32.totalorder %s22, 0
      %p130 = por %p128, %p129
      %p131 = scmp.ne.s32.totalorder %s119, %s120
      %p132 = scmp.eq.s32.totalorder %s23, 1
      %p133 = por %p131, %p132
      %p135 = scmp.ne.s32.totalorder %s120, %s134
      %p136 = scmp.eq.s32.totalorder %s23, 0
      %p137 = por %p135, %p136
      %s139 = sadd.s32 %s138, 1
      %p142 = scmp.eq.s32.totalorder %s17, 1
      %p143 = scmp.ne.s32.totalorder %s138, %s140
      %p144 = scmp.eq.s32.totalorder %s17, 0
      %p145 = por %p143, %p144
      %p146 = scmp.ne.s32.totalorder %s138, %s140
      %p147 = scmp.eq.s32.totalorder %s22, 1
      %p148 = por %p146, %p147
      %p149 = scmp.ne.s32.totalorder %s140, %s141
      %p150 = scmp.eq.s32.totalorder %s22, 0
      %p151 = por %p149, %p150
      %p152 = scmp.ne.s32.totalorder %s140, %s141
      %p153 = scmp.eq.s32.totalorder %s23, 1
      %p154 = por %p152, %p153
      %p156 = scmp.ne.s32.totalorder %s141, %s155
      %p157 = scmp.eq.s32.totalorder %s23, 0
      %p158 = por %p156, %p157
      %s160 = sadd.s32 %s159, 1
      %p163 = scmp.eq.s32.totalorder %s17, 1
      %p164 = scmp.ne.s32.totalorder %s159, %s161
      %p165 = scmp.eq.s32.totalorder %s17, 0
      %p166 = por %p164, %p165
      %p167 = scmp.ne.s32.totalorder %s159, %s161
      %p168 = scmp.eq.s32.totalorder %s22, 1
      %p169 = por %p167, %p168
      %p170 = scmp.ne.s32.totalorder %s161, %s162
      %p171 = scmp.eq.s32.totalorder %s22, 0
      %p172 = por %p170, %p171
      %p173 = scmp.ne.s32.totalorder %s161, %s162
      %p174 = scmp.eq.s32.totalorder %s23, 1
      %p175 = por %p173, %p174
      %p177 = scmp.ne.s32.totalorder %s162, %s176
      %p178 = scmp.eq.s32.totalorder %s23, 0
      %p179 = por %p177, %p178
      %s181 = sadd.s32 %s180, 1
      %p184 = scmp.eq.s32.totalorder %s17, 1
      %p185 = scmp.ne.s32.totalorder %s180, %s182
      %p186 = scmp.eq.s32.totalorder %s17, 0
      %p187 = por %p185, %p186
      %p188 = scmp.ne.s32.totalorder %s180, %s182
      %p189 = scmp.eq.s32.totalorder %s22, 1
      %p190 = por %p188, %p189
      %p191 = scmp.ne.s32.totalorder %s182, %s183
      %p192 = scmp.eq.s32.totalorder %s22, 0
      %p193 = por %p191, %p192
      %p194 = scmp.ne.s32.totalorder %s182, %s183
      %p195 = scmp.eq.s32.totalorder %s23, 1
      %p196 = por %p194, %p195
      %p198 = scmp.ne.s32.totalorder %s183, %s197
      %p199 = scmp.eq.s32.totalorder %s23, 0
      %p200 = por %p198, %p199
      %s201 = ssub.s32 %s24, %s36
      %s202 = ssub.s32 %s25, %s32
      %s203 = sor.u32 %s201, %s202
      %p204 = scmp.eq.s32.totalorder %s203, 0
      %s206 = sadd.s32 %s205, 1
      %s207 = scalar_select %p204, %s205, %s206
      %p210 = pneg %p204
      %p211 = scmp.eq.s32.totalorder %s17, 1
      %p212 = por %p210, %p211
      %p213 = scmp.ne.s32.totalorder %s205, %s208
      %p214 = scmp.eq.s32.totalorder %s17, 0
      %p215 = por %p213, %p214
      %p216 = scmp.ne.s32.totalorder %s205, %s208
      %p217 = scmp.eq.s32.totalorder %s22, 1
      %p218 = por %p216, %p217
      %p219 = scmp.ne.s32.totalorder %s208, %s209
      %p220 = scmp.eq.s32.totalorder %s22, 0
      %p221 = por %p219, %p220
      %p222 = scmp.ne.s32.totalorder %s208, %s209
      %p223 = scmp.eq.s32.totalorder %s23, 1
      %p224 = por %p222, %p223
      %p226 = scmp.ne.s32.totalorder %s209, %s225
      %p227 = scmp.eq.s32.totalorder %s23, 0
      %p228 = por %p226, %p227
      %p229 = scmp.le.s32.totalorder 1, %s17
      %p230 = scmp.lt.s32.totalorder %s17, 3
      %p231 = pnand %p229, %p230
      %p232 = pneg %p231
      // Predicated region
      $region9: #{tpu_custom_call.1} parent=5 // pred_check
        _
      $region10: #{tpu_custom_call.1} parent=5 // pred_check_branch
        %234 = sbr.rel (%p231) target = $region12
      $region11: #{tpu_custom_call.1} parent=5 // pred_region
        %s235 = ssub.s32 %s17, 1
        // Predicated region
        $region13: #{tpu_custom_call.1} parent=11 // pred_check
          %p236 = pneg %p130
        $region14: #{tpu_custom_call.1} parent=11 // pred_check_branch
          %238 = sbr.rel (%p236) target = $region16
        $region15: #{tpu_custom_call.1} parent=11 // pred_region
          _
        $region16: #{tpu_custom_call.1} parent=11 // pred_fallthru
          _
        // Predicated region
        $region17: #{tpu_custom_call.1} parent=11 // pred_check
          %p239 = pneg %p151
        $region18: #{tpu_custom_call.1} parent=11 // pred_check_branch
          %241 = sbr.rel (%p239) target = $region20
        $region19: #{tpu_custom_call.1} parent=11 // pred_region
          _
        $region20: #{tpu_custom_call.1} parent=11 // pred_fallthru
          _
        // Predicated region
        $region21: #{tpu_custom_call.1} parent=11 // pred_check
          %p242 = pneg %p172
        $region22: #{tpu_custom_call.1} parent=11 // pred_check_branch
          %244 = sbr.rel (%p242) target = $region24
        $region23: #{tpu_custom_call.1} parent=11 // pred_region
          %s246 = ssub.s32 2048, 2048
          %247 = vsyncadd [#allocation4], %s246
          %s248 = sshll.u32 [#allocation3], 4
          %s249 = int_to_ptr.vmem [resolvable:$true] %s248
          %254 = dma.hbm_to_vmem [thread:$0]  %s5, 2048, %s249, [#allocation4], 128, 128, 8
        $region24: #{tpu_custom_call.1} parent=11 // pred_fallthru
          _
        // Predicated region
        $region25: #{tpu_custom_call.1} parent=11 // pred_check
          %p255 = pneg %p193
        $region26: #{tpu_custom_call.1} parent=11 // pred_check_branch
          %257 = sbr.rel (%p255) target = $region28
        $region27: #{tpu_custom_call.1} parent=11 // pred_region
          _
        $region28: #{tpu_custom_call.1} parent=11 // pred_fallthru
          _
      $region12: #{tpu_custom_call.1} parent=5 // pred_fallthru
        _
      %p258 = scmp.lt.s32.totalorder %s17, 2
      // Predicated region
      $region29: #{tpu_custom_call.1} parent=5 // pred_check
        %p259 = pneg %p258
      $region30: #{tpu_custom_call.1} parent=5 // pred_check_branch
        %261 = sbr.rel (%p259) target = $region32
      $region31: #{tpu_custom_call.1} parent=5 // pred_region
        // Predicated region
        $region33: #{tpu_custom_call.1} parent=31 // pred_check
          %p262 = pneg %p49
        $region34: #{tpu_custom_call.1} parent=31 // pred_check_branch
          %264 = sbr.rel (%p262) target = $region36
        $region35: #{tpu_custom_call.1} parent=31 // pred_region
          %p265 = scmp.lt.s32.totalorder %s24, 1
          %s266 = scalar_select %p265, %s24, 1
          %s267 = smul.addr %s266, 2
          %s268 = smul.addr %s267, 8
          %s269 = scalar_lea.vmem %s0, %s268
        $region36: #{tpu_custom_call.1} parent=31 // pred_fallthru
          _
        // Predicated region
        $region37: #{tpu_custom_call.1} parent=31 // pred_check
          %p270 = pneg %p75
        $region38: #{tpu_custom_call.1} parent=31 // pred_check_branch
          %272 = sbr.rel (%p270) target = $region40
        $region39: #{tpu_custom_call.1} parent=31 // pred_region
          %p273 = scmp.lt.s32.totalorder %s24, 1
          %s274 = scalar_select %p273, %s24, 1
          %s275 = smul.addr %s274, 2
          %s276 = smul.addr %s275, 8
          %s277 = scalar_lea.vmem %s1, %s276
        $region40: #{tpu_custom_call.1} parent=31 // pred_fallthru
          _
        // Predicated region
        $region41: #{tpu_custom_call.1} parent=31 // pred_check
          %p278 = pneg %p103
        $region42: #{tpu_custom_call.1} parent=31 // pred_check_branch
          %280 = sbr.rel (%p278) target = $region44
        $region43: #{tpu_custom_call.1} parent=31 // pred_region
          %p281 = scmp.lt.s32.totalorder %s24, 1
          %s282 = scalar_select %p281, %s24, 1
          %p283 = scmp.lt.s32.totalorder %s25, 0
          %s284 = scalar_select %p283, %s25, 0
          %s285 = sadd.s32 %s284, %s282
          %s286 = smul.addr %s285, 8
          %s287 = scalar_lea.vmem %s2, %s286
        $region44: #{tpu_custom_call.1} parent=31 // pred_fallthru
          _
      $region32: #{tpu_custom_call.1} parent=5 // pred_fallthru
        _
      %p288 = scmp.le.s32.totalorder 1, %s17
      %p289 = scmp.lt.s32.totalorder %s17, 3
      %p290 = pnand %p288, %p289
      %p291 = pneg %p290
      // Predicated region
      $region45: #{tpu_custom_call.1} parent=5 // pred_check
        _
      $region46: #{tpu_custom_call.1} parent=5 // pred_check_branch
        %293 = sbr.rel (%p290) target = $region48
      $region47: #{tpu_custom_call.1} parent=5 // pred_region
        %s294 = ssub.s32 %s17, 1
        // Predicated region
        $region49: #{tpu_custom_call.1} parent=47 // pred_check
          %p295 = pneg %p172
        $region50: #{tpu_custom_call.1} parent=47 // pred_check_branch
          %297 = sbr.rel (%p295) target = $region52
        $region51: #{tpu_custom_call.1} parent=47 // pred_region
          %298 = dma.done [#allocation4], 2048
        $region52: #{tpu_custom_call.1} parent=47 // pred_fallthru
          _
        %p299 = scmp.lt.s32.totalorder %s26, 1
        %s300 = scalar_select %p299, %s26, 1
        %s301 = smul.addr %s300, 2
        %s302 = smul.addr %s301, 8
        %s303 = scalar_lea.vmem %s0, %s302
        %p304 = pneg %p55
        %p305 = pneg %p52
        %p306 = scmp.lt.s32.totalorder %s26, 1
        %s307 = scalar_select %p306, %s26, 1
        %s308 = smul.addr %s307, 2
        %s309 = smul.addr %s308, 8
        %s310 = scalar_lea.vmem %s1, %s309
        %p311 = pneg %p81
        %p312 = pneg %p78
        %p313 = scmp.lt.s32.totalorder %s26, 1
        %s314 = scalar_select %p313, %s26, 1
        %p315 = scmp.lt.s32.totalorder %s27, 0
        %s316 = scalar_select %p315, %s27, 0
        %s317 = sadd.s32 %s316, %s314
        %s318 = smul.addr %s317, 8
        %s319 = scalar_lea.vmem %s2, %s318
        %p320 = pneg %p109
        %p321 = pneg %p106
        %p322 = pneg %p130
        %p323 = pneg %p127
        %p324 = pneg %p151
        %p325 = pneg %p148
        %p326 = pneg %p172
        %p327 = pneg %p169
        %p328 = pneg %p193
        %p329 = pneg %p190
        %p330 = pneg %p221
        %p331 = pneg %p218
        %s332 = sand.u32 %s208, 1
        %s333 = scalar_lea.sflag [#allocation5], %s332
        %s334 = sand.u32 %s208, 1
        %s335 = smul.addr %s334, 8
        %s336 = scalar_lea.vmem [#allocation6], %s335
        %p337 = scmp.lt.s32.totalorder %s26, 1
        %s338 = scalar_select %p337, %s26, 1
        %s339 = smul.addr %s338, 2
        %s340 = smul.addr %s339, 8
        %s341 = scalar_lea.vmem %s0, %s340
        %p342 = scmp.lt.s32.totalorder %s26, 1
        %s343 = scalar_select %p342, %s26, 1
        %s344 = smul.addr %s343, 2
        %s345 = smul.addr %s344, 8
        %s346 = scalar_lea.vmem %s1, %s345
        %p347 = scmp.lt.s32.totalorder %s26, 1
        %s348 = scalar_select %p347, %s26, 1
        %p349 = scmp.lt.s32.totalorder %s27, 0
        %s350 = scalar_select %p349, %s27, 0
        %s351 = sadd.s32 %s350, %s348
        %s352 = smul.addr %s351, 8
        %s353 = scalar_lea.vmem %s2, %s352
        %p355 = scmp.eq.s32.totalorder %s27, 0
        // Predicated region
        $region53: #{tpu_custom_call.1} parent=47 // pred_check
          %p356 = pneg %p355
        $region54: #{tpu_custom_call.1} parent=47 // pred_check_branch
          %358 = sbr.rel (%p356) target = $region56
        $region55: #{tpu_custom_call.1} parent=47 // pred_region
          %v359 = vld [vmem:[%s341] sm:$0xff]
          %v360 = vld [vmem:[%s341 + $0x8] sm:$0xff]
          %v361 = vpack.c.bf16 %v360, %v359
          %v362 = vld [vmem:[%s3] sm:$0xf]
          %v363 = vpack.c.bf16 %v362, %v362
          %v364 = vld [vmem:[%s4] sm:$0x1]
          %v366 = vlaneseq
          %v367 = vshrl.u32 %v366, 7
          %v368 = vsub.s32 0, %v367
          %v369 = vrot.slane %v364, %v368
          %vm371 = vcmask 31744
          %v373 = vsel %vm371, %v361, 0
          %vm375 = vcmask 1041408
          %v377 = vsel %vm375, %v363, 0
          %379 = vmatprep.subr.bf16.mxu0 0
          %380 = vmatpush1.bf16.msra.mxu0 %v377
          %381 = vmatprep.subr.bf16.mxu0 0
          %382 = vmatpush1.bf16.msra.mxu0 0
          %383 = vmatprep.subr.bf16.mxu0 0
          %384 = vmatpush1.bf16.msra.mxu0 0
          %385 = vmatprep.subr.bf16.mxu0 0
          %386 = vmatpush1.bf16.msra.mxu0 0
          %387 = vmatprep.subr.bf16.mxu0 0
          %388 = vmatpush1.bf16.msra.mxu0 0
          %389 = vmatprep.subr.bf16.mxu0 0
          %390 = vmatpush1.bf16.msra.mxu0 0
          %391 = vmatprep.subr.bf16.mxu0 0
          %392 = vmatpush1.bf16.msra.mxu0 0
          %393 = vmatprep.subr.bf16.mxu0 0
          %394 = vmatpush1.bf16.msra.mxu0 0
          %395 = vmatprep.subr.bf16.mxu0 0
          %396 = vmatpush1.bf16.msra.mxu0 0
          %397 = vmatprep.subr.bf16.mxu0 0
          %398 = vmatpush1.bf16.msra.mxu0 0
          %399 = vmatprep.subr.bf16.mxu0 0
          %400 = vmatpush1.bf16.msra.mxu0 0
          %401 = vmatprep.subr.bf16.mxu0 0
          %402 = vmatpush1.bf16.msra.mxu0 0
          %403 = vmatprep.subr.bf16.mxu0 0
          %404 = vmatpush1.bf16.msra.mxu0 0
          %405 = vmatprep.subr.bf16.mxu0 0
          %406 = vmatpush1.bf16.msra.mxu0 0
          %407 = vmatprep.subr.bf16.mxu0 0
          %408 = vmatpush1.bf16.msra.mxu0 0
          %409 = vmatprep.subr.bf16.mxu0 0
          %410 = vmatpush1.bf16.msra.mxu0 0
          %411 = vmatprep.mubr.bf16.mxu0 0
          %412 = vmatmul.mubr.bf16.gmra.mrb[0].mxu0 %v373
          %v413 = vpop.f32.mrb[0].mxu0
          %v414 = vadd.f32 %v369, %v413
          %v415 = vpop.f32.mrb[0].mxu0
          %v416 = vpop.f32.mrb[0].mxu0
          %v417 = vadd.f32 %v369, %v416
          %v418 = vpop.f32.mrb[0].mxu0
          %419 = vdwg.mxu0
          %v420 = vmax.f32 %v414, 0.0
          %v421 = vmax.f32 %v417, 0.0
          %v422 = vpack.c.bf16 %v421, %v420
          %v423 = vld [vmem:[#allocation3] sm:$0xff]
          %v424 = vld [vmem:[#allocation3 + $0x8] sm:$0xff]
          %v425 = vld [vmem:[#allocation3 + $0x10] sm:$0xff]
          %v426 = vld [vmem:[#allocation3 + $0x18] sm:$0xff]
          %v427 = vld [vmem:[#allocation3 + $0x20] sm:$0xff]
          %v428 = vld [vmem:[#allocation3 + $0x28] sm:$0xff]
          %v429 = vld [vmem:[#allocation3 + $0x30] sm:$0xff]
          %v430 = vld [vmem:[#allocation3 + $0x38] sm:$0xff]
          %v431 = vld [vmem:[#allocation3 + $0x40] sm:$0xff]
          %v432 = vld [vmem:[#allocation3 + $0x48] sm:$0xff]
          %v433 = vld [vmem:[#allocation3 + $0x50] sm:$0xff]
          %v434 = vld [vmem:[#allocation3 + $0x58] sm:$0xff]
          %v435 = vld [vmem:[#allocation3 + $0x60] sm:$0xff]
          %v436 = vld [vmem:[#allocation3 + $0x68] sm:$0xff]
          %v437 = vld [vmem:[#allocation3 + $0x70] sm:$0xff]
          %v438 = vld [vmem:[#allocation3 + $0x78] sm:$0xff]
          %v439 = vpack.c.bf16 %v424, %v423
          %v440 = vpack.c.bf16 %v426, %v425
          %v441 = vpack.c.bf16 %v428, %v427
          %v442 = vpack.c.bf16 %v430, %v429
          %v443 = vpack.c.bf16 %v432, %v431
          %v444 = vpack.c.bf16 %v434, %v433
          %v445 = vpack.c.bf16 %v436, %v435
          %v446 = vpack.c.bf16 %v438, %v437
          %v447 = vld [vmem:[%s6] sm:$0x1]
          %v449 = vlaneseq
          %v450 = vshrl.u32 %v449, 7
          %v451 = vsub.s32 0, %v450
          %v452 = vrot.slane %v447, %v451
          %454 = vmatprep.subr.bf16.mxu0 0
          %455 = vmatpush1.bf16.msra.mxu0 %v439
          %456 = vmatprep.subr.bf16.mxu0 0
          %457 = vmatpush1.bf16.msra.mxu0 %v440
          %458 = vmatprep.subr.bf16.mxu0 0
          %459 = vmatpush1.bf16.msra.mxu0 %v441
          %460 = vmatprep.subr.bf16.mxu0 0
          %461 = vmatpush1.bf16.msra.mxu0 %v442
          %462 = vmatprep.subr.bf16.mxu0 0
          %463 = vmatpush1.bf16.msra.mxu0 %v443
          %464 = vmatprep.subr.bf16.mxu0 0
          %465 = vmatpush1.bf16.msra.mxu0 %v444
          %466 = vmatprep.subr.bf16.mxu0 0
          %467 = vmatpush1.bf16.msra.mxu0 %v445
          %468 = vmatprep.subr.bf16.mxu0 0
          %469 = vmatpush1.bf16.msra.mxu0 %v446
          %470 = vmatprep.subr.bf16.mxu0 0
          %471 = vmatpush1.bf16.msra.mxu0 0
          %472 = vmatprep.subr.bf16.mxu0 0
          %473 = vmatpush1.bf16.msra.mxu0 0
          %474 = vmatprep.subr.bf16.mxu0 0
          %475 = vmatpush1.bf16.msra.mxu0 0
          %476 = vmatprep.subr.bf16.mxu0 0
          %477 = vmatpush1.bf16.msra.mxu0 0
          %478 = vmatprep.subr.bf16.mxu0 0
          %479 = vmatpush1.bf16.msra.mxu0 0
          %480 = vmatprep.subr.bf16.mxu0 0
          %481 = vmatpush1.bf16.msra.mxu0 0
          %482 = vmatprep.subr.bf16.mxu0 0
          %483 = vmatpush1.bf16.msra.mxu0 0
          %484 = vmatprep.subr.bf16.mxu0 0
          %485 = vmatpush1.bf16.msra.mxu0 0
          %486 = vmatprep.mubr.bf16.mxu0 0
          %487 = vmatmul.mubr.bf16.gmra.mrb[0].mxu0 %v422
          %v488 = vpop.f32.mrb[0].mxu0
          %v489 = vadd.f32 %v452, %v488
          %v490 = vpop.f32.mrb[0].mxu0
          %v491 = vpop.f32.mrb[0].mxu0
          %v492 = vadd.f32 %v452, %v491
          %v493 = vpop.f32.mrb[0].mxu0
          %494 = vdwg.mxu0
          %v495 = vpack.c.bf16 %v492, %v489
          %496 = vst [vmem:[#allocation2] sm:$0xff] %v495
        $region56: #{tpu_custom_call.1} parent=47 // pred_fallthru
          _
        %v497 = vld [vmem:[%s353] sm:$0xff]
        %v498 = vpack.c.bf16 %v497, %v497
        %v499 = vld [vmem:[%s3] sm:$0xf]
        %v500 = vpack.c.bf16 %v499, %v499
        %v501 = vld [vmem:[%s4] sm:$0x1]
        %v503 = vlaneseq
        %v504 = vshrl.u32 %v503, 7
        %v505 = vsub.s32 0, %v504
        %v506 = vrot.slane %v501, %v505
        %vm508 = vcmask 31744
        %v510 = vsel %vm508, %v498, 0
        %vm512 = vcmask 1041408
        %v514 = vsel %vm512, %v500, 0
        %516 = vmatprep.subr.bf16.mxu0 0
        %517 = vmatpush1.bf16.msra.mxu0 %v514
        %518 = vmatprep.subr.bf16.mxu0 0
        %519 = vmatpush1.bf16.msra.mxu0 0
        %520 = vmatprep.subr.bf16.mxu0 0
        %521 = vmatpush1.bf16.msra.mxu0 0
        %522 = vmatprep.subr.bf16.mxu0 0
        %523 = vmatpush1.bf16.msra.mxu0 0
        %524 = vmatprep.subr.bf16.mxu0 0
        %525 = vmatpush1.bf16.msra.mxu0 0
        %526 = vmatprep.subr.bf16.mxu0 0
        %527 = vmatpush1.bf16.msra.mxu0 0
        %528 = vmatprep.subr.bf16.mxu0 0
        %529 = vmatpush1.bf16.msra.mxu0 0
        %530 = vmatprep.subr.bf16.mxu0 0
        %531 = vmatpush1.bf16.msra.mxu0 0
        %532 = vmatprep.subr.bf16.mxu0 0
        %533 = vmatpush1.bf16.msra.mxu0 0
        %534 = vmatprep.subr.bf16.mxu0 0
        %535 = vmatpush1.bf16.msra.mxu0 0
        %536 = vmatprep.subr.bf16.mxu0 0
        %537 = vmatpush1.bf16.msra.mxu0 0
        %538 = vmatprep.subr.bf16.mxu0 0
        %539 = vmatpush1.bf16.msra.mxu0 0
        %540 = vmatprep.subr.bf16.mxu0 0
        %541 = vmatpush1.bf16.msra.mxu0 0
        %542 = vmatprep.subr.bf16.mxu0 0
        %543 = vmatpush1.bf16.msra.mxu0 0
        %544 = vmatprep.subr.bf16.mxu0 0
        %545 = vmatpush1.bf16.msra.mxu0 0
        %546 = vmatprep.subr.bf16.mxu0 0
        %547 = vmatpush1.bf16.msra.mxu0 0
        %548 = vmatprep.mubr.bf16.mxu0 0
        %549 = vmatmul.mubr.bf16.gmra.mrb[0].mxu0 %v510
        %v550 = vpop.f32.mrb[0].mxu0
        %v551 = vadd.f32 %v506, %v550
        %v552 = vpop.f32.mrb[0].mxu0
        %v553 = vpop.f32.mrb[0].mxu0
        %v554 = vpop.f32.mrb[0].mxu0
        %555 = vdwg.mxu0
        %v556 = vmax.f32 %v551, 0.0
        %v557 = vpack.c.bf16 %v556, %v556
        %v558 = vld [vmem:[#allocation3] sm:$0xff]
        %v559 = vld [vmem:[#allocation3 + $0x8] sm:$0xff]
        %v560 = vld [vmem:[#allocation3 + $0x10] sm:$0xff]
        %v561 = vld [vmem:[#allocation3 + $0x18] sm:$0xff]
        %v562 = vld [vmem:[#allocation3 + $0x20] sm:$0xff]
        %v563 = vld [vmem:[#allocation3 + $0x28] sm:$0xff]
        %v564 = vld [vmem:[#allocation3 + $0x30] sm:$0xff]
        %v565 = vld [vmem:[#allocation3 + $0x38] sm:$0xff]
        %v566 = vld [vmem:[#allocation3 + $0x40] sm:$0xff]
        %v567 = vld [vmem:[#allocation3 + $0x48] sm:$0xff]
        %v568 = vld [vmem:[#allocation3 + $0x50] sm:$0xff]
        %v569 = vld [vmem:[#allocation3 + $0x58] sm:$0xff]
        %v570 = vld [vmem:[#allocation3 + $0x60] sm:$0xff]
        %v571 = vld [vmem:[#allocation3 + $0x68] sm:$0xff]
        %v572 = vld [vmem:[#allocation3 + $0x70] sm:$0xff]
        %v573 = vld [vmem:[#allocation3 + $0x78] sm:$0xff]
        %v574 = vpack.c.bf16 %v559, %v558
        %v575 = vpack.c.bf16 %v561, %v560
        %v576 = vpack.c.bf16 %v563, %v562
        %v577 = vpack.c.bf16 %v565, %v564
        %v578 = vpack.c.bf16 %v567, %v566
        %v579 = vpack.c.bf16 %v569, %v568
        %v580 = vpack.c.bf16 %v571, %v570
        %v581 = vpack.c.bf16 %v573, %v572
        %v582 = vld [vmem:[%s6] sm:$0x1]
        %v584 = vlaneseq
        %v585 = vshrl.u32 %v584, 7
        %v586 = vsub.s32 0, %v585
        %v587 = vrot.slane %v582, %v586
        %589 = vmatprep.subr.bf16.mxu0 0
        %590 = vmatpush1.bf16.msra.mxu0 %v574
        %591 = vmatprep.subr.bf16.mxu0 0
        %592 = vmatpush1.bf16.msra.mxu0 %v575
        %593 = vmatprep.subr.bf16.mxu0 0
        %594 = vmatpush1.bf16.msra.mxu0 %v576
        %595 = vmatprep.subr.bf16.mxu0 0
        %596 = vmatpush1.bf16.msra.mxu0 %v577
        %597 = vmatprep.subr.bf16.mxu0 0
        %598 = vmatpush1.bf16.msra.mxu0 %v578
        %599 = vmatprep.subr.bf16.mxu0 0
        %600 = vmatpush1.bf16.msra.mxu0 %v579
        %601 = vmatprep.subr.bf16.mxu0 0
        %602 = vmatpush1.bf16.msra.mxu0 %v580
        %603 = vmatprep.subr.bf16.mxu0 0
        %604 = vmatpush1.bf16.msra.mxu0 %v581
        %605 = vmatprep.subr.bf16.mxu0 0
        %606 = vmatpush1.bf16.msra.mxu0 0
        %607 = vmatprep.subr.bf16.mxu0 0
        %608 = vmatpush1.bf16.msra.mxu0 0
        %609 = vmatprep.subr.bf16.mxu0 0
        %610 = vmatpush1.bf16.msra.mxu0 0
        %611 = vmatprep.subr.bf16.mxu0 0
        %612 = vmatpush1.bf16.msra.mxu0 0
        %613 = vmatprep.subr.bf16.mxu0 0
        %614 = vmatpush1.bf16.msra.mxu0 0
        %615 = vmatprep.subr.bf16.mxu0 0
        %616 = vmatpush1.bf16.msra.mxu0 0
        %617 = vmatprep.subr.bf16.mxu0 0
        %618 = vmatpush1.bf16.msra.mxu0 0
        %619 = vmatprep.subr.bf16.mxu0 0
        %620 = vmatpush1.bf16.msra.mxu0 0
        %621 = vmatprep.mubr.bf16.mxu0 0
        %622 = vmatmul.mubr.bf16.gmra.mrb[0].mxu0 %v557
        %v623 = vpop.f32.mrb[0].mxu0
        %v624 = vadd.f32 %v587, %v623
        %v625 = vpop.f32.mrb[0].mxu0
        %v626 = vpop.f32.mrb[0].mxu0
        %v627 = vpop.f32.mrb[0].mxu0
        %628 = vdwg.mxu0
        %v629 = vmul.f32 %v624, 0.17677669
        %v630 = vpack.c.bf16 %v629, %v629
        %v631 = vld [vmem:[#allocation2] sm:$0xff]
        %632 = vmatprep.subr.bf16.mxu0 0
        %633 = vmatpush1.bf16.xpose.msra.mxu0 %v631
        %634 = vmatprep.subr.bf16.mxu0 0
        %635 = vmatpush1.bf16.xpose.msra.mxu0 0
        %636 = vmatprep.subr.bf16.mxu0 0
        %637 = vmatpush1.bf16.xpose.msra.mxu0 0
        %638 = vmatprep.subr.bf16.mxu0 0
        %639 = vmatpush1.bf16.xpose.msra.mxu0 0
        %640 = vmatprep.subr.bf16.mxu0 0
        %641 = vmatpush1.bf16.xpose.msra.mxu0 0
        %642 = vmatprep.subr.bf16.mxu0 0
        %643 = vmatpush1.bf16.xpose.msra.mxu0 0
        %644 = vmatprep.subr.bf16.mxu0 0
        %645 = vmatpush1.bf16.xpose.msra.mxu0 0
        %646 = vmatprep.subr.bf16.mxu0 0
        %647 = vmatpush1.bf16.xpose.msra.mxu0 0
        %648 = vmatprep.subr.bf16.mxu0 0
        %649 = vmatpush1.bf16.xpose.msra.mxu0 0
        %650 = vmatprep.subr.bf16.mxu0 0
        %651 = vmatpush1.bf16.xpose.msra.mxu0 0
        %652 = vmatprep.subr.bf16.mxu0 0
        %653 = vmatpush1.bf16.xpose.msra.mxu0 0
        %654 = vmatprep.subr.bf16.mxu0 0
        %655 = vmatpush1.bf16.xpose.msra.mxu0 0
        %656 = vmatprep.subr.bf16.mxu0 0
        %657 = vmatpush1.bf16.xpose.msra.mxu0 0
        %658 = vmatprep.subr.bf16.mxu0 0
        %659 = vmatpush1.bf16.xpose.msra.mxu0 0
        %660 = vmatprep.subr.bf16.mxu0 0
        %661 = vmatpush1.bf16.xpose.msra.mxu0 0
        %662 = vmatprep.subr.bf16.mxu0 0
        %663 = vmatpush1.bf16.xpose.msra.mxu0 0
        %664 = vmatprep.mubr.bf16.mxu0 0
        %665 = vmatmul.mubr.bf16.gmra.mrb[0].mxu0 %v630
        %v666 = vpop.f32.mrb[0].mxu0
        %v667 = vadd.f32 0.0, %v666
        %v668 = vpop.f32.mrb[0].mxu0
        %v669 = vpop.f32.mrb[0].mxu0
        %v670 = vpop.f32.mrb[0].mxu0
        %671 = vdwg.mxu0
        %vm672 = vcmask 130048
        %v673 = vsel %vm672, %v667, -inf
        %674 = vmax.xlane.f32.xlu0 %v673
        %v675 = vpop.xlane.xlu0 %674
        %v676 = vsub.f32 %v667, %v675
        %v677 = vmul.f32 %v676, 1.442695
        %v678 = vpow.pop %v677
        %v679 = vsel %vm672, %v678, 0.0
        %680 = vadd.xlane.f32.xlu0 %v679
        %v681 = vpop.xlane.xlu0 %680
        %v682 = vrcp.pop %v681
        %v683 = vmul.f32 %v678, %v682
        %v684 = vpack.c.bf16 %v683, %v683
        %v685 = vld [vmem:[%s346] sm:$0xff]
        %v686 = vld [vmem:[%s346 + $0x8] sm:$0xff]
        %v687 = vpack.c.bf16 %v686, %v685
        %v689 = vsel %vm672, %v684, 0
        %691 = vmatprep.subr.bf16.mxu0 0
        %692 = vmatpush1.bf16.msra.mxu0 %v687
        %693 = vmatprep.subr.bf16.mxu0 0
        %694 = vmatpush1.bf16.msra.mxu0 0
        %695 = vmatprep.subr.bf16.mxu0 0
        %696 = vmatpush1.bf16.msra.mxu0 0
        %697 = vmatprep.subr.bf16.mxu0 0
        %698 = vmatpush1.bf16.msra.mxu0 0
        %699 = vmatprep.subr.bf16.mxu0 0
        %700 = vmatpush1.bf16.msra.mxu0 0
        %701 = vmatprep.subr.bf16.mxu0 0
        %702 = vmatpush1.bf16.msra.mxu0 0
        %703 = vmatprep.subr.bf16.mxu0 0
        %704 = vmatpush1.bf16.msra.mxu0 0
        %705 = vmatprep.subr.bf16.mxu0 0
        %706 = vmatpush1.bf16.msra.mxu0 0
        %707 = vmatprep.subr.bf16.mxu0 0
        %708 = vmatpush1.bf16.msra.mxu0 0
        %709 = vmatprep.subr.bf16.mxu0 0
        %710 = vmatpush1.bf16.msra.mxu0 0
        %711 = vmatprep.subr.bf16.mxu0 0
        %712 = vmatpush1.bf16.msra.mxu0 0
        %713 = vmatprep.subr.bf16.mxu0 0
        %714 = vmatpush1.bf16.msra.mxu0 0
        %715 = vmatprep.subr.bf16.mxu0 0
        %716 = vmatpush1.bf16.msra.mxu0 0
        %717 = vmatprep.subr.bf16.mxu0 0
        %718 = vmatpush1.bf16.msra.mxu0 0
        %719 = vmatprep.subr.bf16.mxu0 0
        %720 = vmatpush1.bf16.msra.mxu0 0
        %721 = vmatprep.subr.bf16.mxu0 0
        %722 = vmatpush1.bf16.msra.mxu0 0
        %723 = vmatprep.mubr.bf16.mxu0 0
        %724 = vmatmul.mubr.bf16.gmra.mrb[0].mxu0 %v689
        %v725 = vpop.f32.mrb[0].mxu0
        %v726 = vadd.f32 0.0, %v725
        %v727 = vpop.f32.mrb[0].mxu0
        %v728 = vpop.f32.mrb[0].mxu0
        %v729 = vpop.f32.mrb[0].mxu0
        %730 = vdwg.mxu0
        %731 = vst [vmem:[%s336] sm:$0xff] %v726
        %s732 = sand.u32 %s208, 1
        %s733 = scalar_lea.sflag [#allocation5], %s732
        %s734 = sand.u32 %s208, 1
        %s735 = smul.addr %s734, 8
        %s736 = scalar_lea.vmem [#allocation6], %s735
        // Predicated region
        $region57: #{tpu_custom_call.1} parent=47 // pred_check
          %p737 = pneg %p218
        $region58: #{tpu_custom_call.1} parent=47 // pred_check_branch
          %739 = sbr.rel (%p737) target = $region60
        $region59: #{tpu_custom_call.1} parent=47 // pred_region
          %s741 = ssub.s32 128, 128
          %742 = vsyncadd %s733, %s741
          %s743 = sadd.s32 %s27, %s26
          %s744 = smul.addr %s743, 128
          %s745 = scalar_lea.hbm %s7, %s744
          %s747 = sshll.u32 %s736, 4
          %s748 = int_to_ptr.vmem [resolvable:$true] %s747
          %750 = dma.vmem_to_hbm [thread:$0]  %s748, 128, %s745, %s733
        $region60: #{tpu_custom_call.1} parent=47 // pred_fallthru
          _
      $region48: #{tpu_custom_call.1} parent=5 // pred_fallthru
        _
      %p751 = scmp.le.s32.totalorder 2, %s17
      // Predicated region
      $region61: #{tpu_custom_call.1} parent=5 // pred_check
        %p752 = pneg %p751
      $region62: #{tpu_custom_call.1} parent=5 // pred_check_branch
        %754 = sbr.rel (%p752) target = $region64
      $region63: #{tpu_custom_call.1} parent=5 // pred_region
        %s755 = ssub.s32 %s17, 2
        // Predicated region
        $region65: #{tpu_custom_call.1} parent=63 // pred_check
          %p756 = pneg %p224
        $region66: #{tpu_custom_call.1} parent=63 // pred_check_branch
          %758 = sbr.rel (%p756) target = $region68
        $region67: #{tpu_custom_call.1} parent=63 // pred_region
          %s759 = sand.u32 %s209, 1
          %s760 = scalar_lea.sflag [#allocation5], %s759
          %s761 = sand.u32 %s209, 1
          %s762 = smul.addr %s761, 8
          %s763 = scalar_lea.vmem [#allocation6], %s762
          %764 = dma.done %s760, 128
        $region68: #{tpu_custom_call.1} parent=63 // pred_fallthru
          _
      $region64: #{tpu_custom_call.1} parent=5 // pred_fallthru
        _
    $region6: #{tpu_custom_call.1} parent=1 // loop_footer
      %s21 = sadd.s32 1, %s17
    $region7: #{tpu_custom_call.1} parent=1 // loop_footer_branch
      %16 = sbr.rel target = $region3
    $region8: #{tpu_custom_call.1} parent=1 // loop_exit
      _
    %765 = vsyncpa [#allocation4], 1
    %s766 = scalar_lea.sflag [#allocation4], 1
    %767 = vsyncpa %s766, 1
    %768 = vsyncpa [#allocation5], 1
    %s769 = scalar_lea.sflag [#allocation5], 1
    %770 = vsyncpa %s769, 1

</llo_original>
